<compile_context>
chip_gen: v6e
topology: v6e:2x2x1
jax: 0.10.0
libtpu: 0.0.40
codegen_flags: <defaults>
</compile_context>

<pallas_src>
import math

import jax
import jax.numpy as jnp
from jax.experimental import pallas as pl
from jax.experimental.pallas import tpu as pltpu


# ----------------------------------------------------------------------------
# Sinusoidal positional-encoding buffer (registered buffer in the module).
# ----------------------------------------------------------------------------
def build_pe_table(d_model: int, max_len: int, dtype=jnp.float32) -> jnp.ndarray:
    """Returns pe of shape (1, max_len, d_model), cast to `dtype`."""
    position = jnp.arange(max_len, dtype=jnp.float32)[:, None]                # (L, 1)
    div_term = jnp.exp(
        jnp.arange(0, d_model, 2, dtype=jnp.float32) * (-math.log(10000.0) / d_model)
    )                                                                         # (D/2,)
    angles = position * div_term                                              # (L, D/2)
    pe = jnp.zeros((max_len, d_model), dtype=jnp.float32)
    pe = pe.at[:, 0::2].set(jnp.sin(angles))
    pe = pe.at[:, 1::2].set(jnp.cos(angles))
    return pe[None].astype(dtype)                                             # (1, L, D)


# ----------------------------------------------------------------------------
# Stateless counter-based PRNG (int32 ops only -> lowers on Mosaic & interpret).
# ----------------------------------------------------------------------------
_M1 = 0x7FEB352D                      # lowbias32 constants (as signed int32)
_M2 = 0x846CA68B - (1 << 32)
_GOLD = 0x9E3779B9 - (1 << 32)


def _srl32(x, k):
    """Logical right shift for int32: arithmetic shift + mask."""
    return jnp.bitwise_and(jnp.right_shift(x, k), (1 << (32 - k)) - 1)


def _mix32(x):
    """lowbias32 avalanche mix; int32 in / int32 out (wraps mod 2^32)."""
    x = jnp.bitwise_xor(x, _srl32(x, 16))
    x = x * jnp.int32(_M1)
    x = jnp.bitwise_xor(x, _srl32(x, 15))
    x = x * jnp.int32(_M2)
    x = jnp.bitwise_xor(x, _srl32(x, 16))
    return x


# ----------------------------------------------------------------------------
# Kernel
# ----------------------------------------------------------------------------
def _make_kernel(p: float, training: bool, rows_per_block: int, n_cols: int):
    keep_prob = 1.0 - p
    inv_keep = (1.0 / keep_prob) if keep_prob > 0.0 else 0.0
    # Drop iff 24-bit hash value < p * 2^24 (exact at p = 0 and p = 1).
    thresh24 = int(round(p * (1 << 24)))

    def kernel(seed_ref, x_ref, pe_ref, o_ref):
        # Upcast to f32 for the add / dropout math; store in o_ref.dtype.
        y = x_ref[...].astype(jnp.float32) + pe_ref[...].astype(jnp.float32)
        if training and p > 0.0:
            # Per-element global counter -> hash -> uniform in [0, 2^24).
            row0 = pl.program_id(0) * rows_per_block
            r = jax.lax.broadcasted_iota(jnp.int32, y.shape, 0) + row0
            c = jax.lax.broadcasted_iota(jnp.int32, y.shape, 1)
            ctr = r * jnp.int32(n_cols) + c
            h = _mix32(jnp.bitwise_xor(ctr, seed_ref[0] * jnp.int32(_GOLD)))
            u24 = _srl32(h, 8)
            keep = u24 >= jnp.int32(thresh24)
            # Inverted dropout; scalar 0.0 (no zeros_like temp).
            y = jnp.where(keep, y * inv_keep, 0.0)
        o_ref[...] = y.astype(o_ref.dtype)

    return kernel


# ----------------------------------------------------------------------------
# Tiling helpers
# ----------------------------------------------------------------------------
def _divisors(n: int):
    out = set()
    i = 1
    while i * i <= n:
        if n % i == 0:
            out.add(i)
            out.add(n // i)
        i += 1
    return sorted(out)


def _choose_row_tile(n_rows: int, seq_len: int, row_bytes: int,
                     budget_bytes: int = 2 * 1024 * 1024) -> int:
    """Largest legal row tile that fits the per-buffer VMEM budget.

    A tile Tr must: (a) divide n_rows (= B*S), (b) be a multiple of seq_len OR
    divide seq_len (so the pe block index is expressible by the index_map),
    (c) be a multiple of 8 or equal n_rows (sublane rule)."""
    max_rows = max(1, budget_bytes // row_bytes)
    cands = [t for t in _divisors(n_rows)
             if (t % seq_len == 0 or seq_len % t == 0)
             and (t % 8 == 0 or t == n_rows)]
    fitting = [t for t in cands if t <= max_rows]
    return max(fitting) if fitting else min(cands)


# ----------------------------------------------------------------------------
# Wrapper
# ----------------------------------------------------------------------------
def positional_encoding(x: jnp.ndarray,
                        pe: jnp.ndarray,
                        *,
                        dropout_p: float = 0.1,
                        training: bool = False,
                        seed: int = 0,
                        vmem_budget_bytes: int = 2 * 1024 * 1024) -> jnp.ndarray:
    """x: (B, S, D); pe: (1, max_len, D) from build_pe_table. Returns (B, S, D)."""
    B, S, D = x.shape
    assert pe.shape[1] >= S and pe.shape[2] == D

    pe2d = pe[0, :S, :].astype(x.dtype)                # (S, D), like pe[:, :x.size(1), :]
    R = B * S
    x2d = x.reshape(R, D)                              # flattened [B*S, D] view
    row_bytes = D * jnp.dtype(x.dtype).itemsize
    tr = _choose_row_tile(R, S, row_bytes, vmem_budget_bytes)

    if tr % S == 0:
        # Each grid step covers whole sequences: pre-tile pe to one block and
        # reuse the same (resident) block every step.
        pe_arg = jnp.tile(pe2d, (tr // S, 1))          # (tr, D)
        pe_index = lambda i, seed_ref: (0, 0)
    else:
        # tr divides S: walk pe blocks with period S // tr.
        n_pe_blocks = S // tr
        pe_arg = pe2d                                  # (S, D)
        pe_index = lambda i, seed_ref: (i % n_pe_blocks, 0)

    seed_arr = jnp.array([seed], dtype=jnp.int32)

    grid_spec = pltpu.PrefetchScalarGridSpec(
        num_scalar_prefetch=1,                         # seed lands in SMEM
        grid=(R // tr,),
        in_specs=[
            pl.BlockSpec((tr, D), lambda i, seed_ref: (i, 0)),   # x row tile
            pl.BlockSpec((tr, D), pe_index),                     # pe tile
        ],
        out_specs=pl.BlockSpec((tr, D), lambda i, seed_ref: (i, 0)),
    )

    out2d = pl.pallas_call(
        _make_kernel(dropout_p, training, tr, D),
        out_shape=jax.ShapeDtypeStruct((R, D), x.dtype),
        grid_spec=grid_spec,
        compiler_params=pltpu.CompilerParams(
            dimension_semantics=("parallel",),         # stateless RNG -> order-independent
        ),
    )(seed_arr, x2d, pe_arg)

    return out2d.reshape(B, S, D)


# ----------------------------------------------------------------------------
# Demo / checks
# ----------------------------------------------------------------------------
if __name__ == "__main__":
    B, S, D = 2, 16, 128          # small, but lane-dense embedding width
    max_len = 64
    p = 0.1

    key = jax.random.PRNGKey(0)
    x = jax.random.normal(key, (B, S, D), dtype=jnp.float32)
    pe = build_pe_table(D, max_len, dtype=x.dtype)

    # Eval mode (dropout is identity) — exact check against the reference.
    out_eval = jax.block_until_ready(
        positional_encoding(x, pe, dropout_p=p, training=False))
    ref = x + pe[:, :S, :]
    assert out_eval.shape == (B, S, D)
    assert jnp.allclose(out_eval, ref, atol=1e-6, rtol=1e-6), "eval-mode mismatch"

    # Training mode — inverted dropout via the stateless counter hash.
    # TODO(synk): RNG stream differs from torch.nn.Dropout (no bit-exact parity).
    out_train = jax.block_until_ready(
        positional_encoding(x, pe, dropout_p=p, training=True, seed=123))
    assert out_train.shape == (B, S, D)
    kept = out_train != 0.0
    inv_keep = 1.0 / (1.0 - p)
    assert jnp.allclose(out_train[kept], (ref * inv_keep)[kept],
                        atol=1e-5, rtol=1e-5), "kept elements not scaled by 1/(1-p)"
    drop_frac = float(1.0 - jnp.mean(kept.astype(jnp.float32)))
    assert 0.0 <= drop_frac <= 0.35, f"unexpected drop fraction {drop_frac}"

    # Narrow-D toy layout (like the original demo, D=32) still correct.
    x2 = jax.random.normal(jax.random.PRNGKey(1), (2, 8, 32), dtype=jnp.float32)
    pe2 = build_pe_table(32, 16, dtype=x2.dtype)
    out2 = jax.block_until_ready(
        positional_encoding(x2, pe2, dropout_p=p, training=False))
    assert jnp.allclose(out2, x2 + pe2[:, :8, :], atol=1e-6, rtol=1e-6)

    print("KERNEL_OK")
</pallas_src>

<mosaic_0001>
module attributes {stable_mosaic.version = 11 : i64} {
  func.func @kernel(%arg0: i32, %arg1: memref<1xi32, #tpu.memory_space<smem>>, %arg2: memref<32x128xf32, #tpu.memory_space<vmem>>, %arg3: memref<32x128xf32, #tpu.memory_space<vmem>>, %arg4: memref<32x128xf32, #tpu.memory_space<vmem>>) attributes {dimension_semantics = [#tpu.dimension_semantics<parallel>], iteration_bounds = array<i64: 1>, scalar_prefetch = 1 : i64, scratch_operands = 0 : i64, tpu.core_type = #tpu.core_type<tc>, window_params = [{transform_indices = @transform_0, window_bounds = array<i64: 32, 128>}, {pipeline_mode = #tpu.pipeline_mode<synchronous>, transform_indices = @transform_1, window_bounds = array<i64: 32, 128>}, {transform_indices = @transform_2, window_bounds = array<i64: 32, 128>}]} {
    %c0 = arith.constant 0 : index
    %c0_0 = arith.constant 0 : index
    %0 = vector.load %arg2[%c0, %c0_0] : memref<32x128xf32, #tpu.memory_space<vmem>>, vector<32x128xf32>
    %c0_1 = arith.constant 0 : index
    %c0_2 = arith.constant 0 : index
    %1 = vector.load %arg3[%c0_1, %c0_2] : memref<32x128xf32, #tpu.memory_space<vmem>>, vector<32x128xf32>
    %2 = arith.addf %0, %1 : vector<32x128xf32>
    %c0_3 = arith.constant 0 : index
    %c0_4 = arith.constant 0 : index
    %3 = vector.load %arg4[%c0_3, %c0_4] : memref<32x128xf32, #tpu.memory_space<vmem>>, vector<32x128xf32>
    tpu.vector_store %arg4[%c0_3, %c0_4], %2 {strides = array<i32>} : memref<32x128xf32, #tpu.memory_space<vmem>>, vector<32x128xf32>,
    return
  }
  func.func @transform_0(%arg0: i32, %arg1: memref<1xi32, #tpu.memory_space<smem>>) -> (i32, i32) {
    %c0_i32 = arith.constant 0 : i32
    %c0_i32_0 = arith.constant 0 : i32
    return %arg0, %c0_i32 : i32, i32
  }
  func.func @transform_1(%arg0: i32, %arg1: memref<1xi32, #tpu.memory_space<smem>>) -> (i32, i32) {
    %c0_i32 = arith.constant 0 : i32
    %c0_i32_0 = arith.constant 0 : i32
    %c0_i32_1 = arith.constant 0 : i32
    return %c0_i32, %c0_i32_0 : i32, i32
  }
  func.func @transform_2(%arg0: i32, %arg1: memref<1xi32, #tpu.memory_space<smem>>) -> (i32, i32) {
    %c0_i32 = arith.constant 0 : i32
    %c0_i32_0 = arith.constant 0 : i32
    return %arg0, %c0_i32 : i32, i32
  }
}

</mosaic_0001>

<llo_original>
// kernel: tpu_custom_call.1
$region0: #{tpu_custom_call.1}
  #allocation0 [shape = 'u32[]', space=smem, size = 0x4, offset = 0x4, fixed_abs, tag = 'smem constant byte address 0x4 - core index']
  #allocation1 [shape = 'u32[144,128]{1,0:T(1,128)}', space=vmem, size = 0x12000, scoped, tag = 'internal scratch']
  #allocation2 [shape = 's32[1]{0}', space=sflag, size = 0x4, scoped, tag = 'scoped memory for tpu_custom_call.1']
  #allocation3 [shape = 's32[1]{0:T(128)S(6)}', space=smem, size = 0x200, scoped, tag = 'prefetched SMEM operand 0']
  %s0 = inlined_call_operand.<no memory space> [shape: s32[1], index: 0, kind: input, shape index: {}]
  %s1 = inlined_call_operand.hbm [shape: f32[32,128], index: 1, kind: input, shape index: {}]
  %s2 = inlined_call_operand.hbm [shape: f32[32,128], index: 2, kind: input, shape index: {}]
  %s3 = inlined_call_operand.hbm [shape: f32[32,128], index: 3, kind: output, shape index: {}]
  %s4 = sld [smem:[#allocation0]]
  $region26: #{tpu_custom_call.1} parent=0
    _
  %s6 = ssub.s32 1, %s4
  %s7 = scalar_select 0, %s6, %s4
  %8 = sst [smem:[#allocation3]] %s0
  $region1: #{tpu_custom_call.1} parent=0
    #allocation4 [shape = 'u8[16384]{0}', space=vmem, size = 0x4000, scoped, tag = 'input window, operand 1, single buffered']
    #allocation5 [shape = 's32[1]{0}', space=sflag, size = 0x4, scoped, tag = 'scoped memory for tpu_custom_call.1']
    #allocation6 [shape = 's32[1]{0}', space=sflag, size = 0x4, scoped, tag = 'scoped memory for tpu_custom_call.1']
    #allocation7 [shape = 'u8[16384]{0}', space=vmem, size = 0x4000, scoped, tag = 'input window, operand 2, single buffered']
    #allocation8 [shape = 's32[1]{0}', space=sflag, size = 0x4, scoped, tag = 'scoped memory for tpu_custom_call.1']
    #allocation9 [shape = 'u8[16384]{0}', space=vmem, size = 0x4000, scoped, tag = 'output window, operand 0, single buffered']
    %9 = vsyncpa [#allocation5], 0
    %10 = vsyncpa [#allocation8], 0
    %11 = vsyncpa [#allocation6], 0
    // Predicated region
    $region2: #{tpu_custom_call.1} parent=1 // pred_check
      _
    $region3: #{tpu_custom_call.1} parent=1 // pred_check_branch
      %13 = sbr.rel (0) target = $region5
    $region4: #{tpu_custom_call.1} parent=1 // pred_region
      %s15 = ssub.s32 512, 512
      %16 = vsyncadd [#allocation5], %s15
      %s17 = sshll.u32 [#allocation4], 4
      %s18 = int_to_ptr.vmem [resolvable:$true] %s17
      %23 = dma.hbm_to_vmem [thread:$0]  %s1, 512, %s18, [#allocation5], 128, 128, 8
    $region5: #{tpu_custom_call.1} parent=1 // pred_fallthru
      _
    // Predicated region
    $region6: #{tpu_custom_call.1} parent=1 // pred_check
      _
    $region7: #{tpu_custom_call.1} parent=1 // pred_check_branch
      %25 = sbr.rel (0) target = $region9
    $region8: #{tpu_custom_call.1} parent=1 // pred_region
      %s27 = ssub.s32 512, 512
      %28 = vsyncadd [#allocation8], %s27
      %s29 = sshll.u32 [#allocation7], 4
      %s30 = int_to_ptr.vmem [resolvable:$true] %s29
      %35 = dma.hbm_to_vmem [thread:$0]  %s2, 512, %s30, [#allocation8], 128, 128, 8
    $region9: #{tpu_custom_call.1} parent=1 // pred_fallthru
      _
    // Predicated region
    $region10: #{tpu_custom_call.1} parent=1 // pred_check
      _
    $region11: #{tpu_custom_call.1} parent=1 // pred_check_branch
      %37 = sbr.rel (0) target = $region13
    $region12: #{tpu_custom_call.1} parent=1 // pred_region
      %38 = dma.done [#allocation5], 512
    $region13: #{tpu_custom_call.1} parent=1 // pred_fallthru
      _
    // Predicated region
    $region14: #{tpu_custom_call.1} parent=1 // pred_check
      _
    $region15: #{tpu_custom_call.1} parent=1 // pred_check_branch
      %40 = sbr.rel (0) target = $region17
    $region16: #{tpu_custom_call.1} parent=1 // pred_region
      %41 = dma.done [#allocation8], 512
    $region17: #{tpu_custom_call.1} parent=1 // pred_fallthru
      _
    %v42 = vld [vmem:[#allocation4] sm:$0xff]
    %v43 = vld [vmem:[#allocation4 + $0x8] sm:$0xff]
    %v44 = vld [vmem:[#allocation4 + $0x10] sm:$0xff]
    %v45 = vld [vmem:[#allocation4 + $0x18] sm:$0xff]
    %v46 = vld [vmem:[#allocation7] sm:$0xff]
    %v47 = vld [vmem:[#allocation7 + $0x8] sm:$0xff]
    %v48 = vld [vmem:[#allocation7 + $0x10] sm:$0xff]
    %v49 = vld [vmem:[#allocation7 + $0x18] sm:$0xff]
    %v50 = vadd.f32 %v42, %v46
    %v51 = vadd.f32 %v43, %v47
    %v52 = vadd.f32 %v44, %v48
    %v53 = vadd.f32 %v45, %v49
    %54 = vst [vmem:[#allocation9] sm:$0xff] %v50
    %55 = vst [vmem:[#allocation9 + $0x8] sm:$0xff] %v51
    %56 = vst [vmem:[#allocation9 + $0x10] sm:$0xff] %v52
    %57 = vst [vmem:[#allocation9 + $0x18] sm:$0xff] %v53
    // Predicated region
    $region18: #{tpu_custom_call.1} parent=1 // pred_check
      _
    $region19: #{tpu_custom_call.1} parent=1 // pred_check_branch
      %59 = sbr.rel (0) target = $region21
    $region20: #{tpu_custom_call.1} parent=1 // pred_region
      %s61 = ssub.s32 512, 512
      %62 = vsyncadd [#allocation6], %s61
      %s63 = sshll.u32 [#allocation9], 4
      %s64 = int_to_ptr.vmem [resolvable:$true] %s63
      %69 = dma.vmem_to_hbm [thread:$0]  %s64, 512, %s3, [#allocation6], 128, 128, 8
    $region21: #{tpu_custom_call.1} parent=1 // pred_fallthru
      _
    // Predicated region
    $region22: #{tpu_custom_call.1} parent=1 // pred_check
      _
    $region23: #{tpu_custom_call.1} parent=1 // pred_check_branch
      %71 = sbr.rel (0) target = $region25
    $region24: #{tpu_custom_call.1} parent=1 // pred_region
      %72 = dma.done [#allocation6], 512
    $region25: #{tpu_custom_call.1} parent=1 // pred_fallthru
      _
    %73 = vsyncpa [#allocation5], 1
    %74 = vsyncpa [#allocation8], 1
    %75 = vsyncpa [#allocation6], 1

</llo_original>
